<compile_context>
chip_gen: v6e
topology: v6e:2x2x1
jax: 0.10.0
libtpu: 0.0.40
codegen_flags: <defaults>
</compile_context>

<pallas_src>
import functools

import jax
import jax.numpy as jnp
from jax import lax
from jax.experimental import pallas as pl
from jax.experimental.pallas import tpu as pltpu

EPS = 1e-8  # Dice default epsilon


def _dice_kernel(x_ref, w_ref, o_ref, *, d):
    # x_ref: (TM, D) rows; w_ref: (1, D) Dice per-feature weight; o_ref: (TM, D)
    x = x_ref[...].astype(jnp.float32)
    w = w_ref[...]  # broadcasts over rows

    mean = jnp.mean(x, axis=-1, keepdims=True)
    diff = x - mean
    # torch.var default is the unbiased estimator (divide by D-1).
    var = jnp.sum(diff * diff, axis=-1, keepdims=True) * (1.0 / (d - 1))
    x_std = diff * lax.rsqrt(var + EPS)
    p = jax.nn.sigmoid(x_std)          # EUP transcendental
    out = p * x + (1.0 - p) * x * w
    o_ref[...] = out.astype(o_ref.dtype)


def dice(x, weight, *, block_m=128):
    """x: (..., D) with D == num_parameters; weight: (D,). Returns same shape."""
    orig_shape = x.shape
    d = orig_shape[-1]
    m = 1
    for s in orig_shape[:-1]:
        m *= s

    x2 = x.reshape(m, d)          # flat, lane-dense (last dim on lanes)
    w2 = weight.reshape(1, d)

    tm = min(block_m, m)
    if m % tm != 0:
        # Fall back to one full block for ragged small inputs (keeps
        # block_shape == full array dims, which is always legal).
        tm = m
    grid = (pl.cdiv(m, tm),)

    kernel = functools.partial(_dice_kernel, d=d)

    out = pl.pallas_call(
        kernel,
        out_shape=jax.ShapeDtypeStruct((m, d), x.dtype),
        grid=grid,
        in_specs=[
            pl.BlockSpec((tm, d), lambda i: (i, 0)),
            pl.BlockSpec((1, d), lambda i: (0, 0)),   # weight: VMEM-resident
        ],
        out_specs=pl.BlockSpec((tm, d), lambda i: (i, 0)),
        compiler_params=pltpu.CompilerParams(
            dimension_semantics=("parallel",),        # v7x: shard across 2 TCs
            vmem_limit_bytes=64 * 1024 * 1024,
        ),
        cost_estimate=pl.CostEstimate(
            flops=10 * m * d,
            transcendentals=m * d,
            bytes_accessed=2 * m * d * 4 + d * 4,
        ),
    )(x2, w2)
    return out.reshape(orig_shape)


def _reference(x, weight):
    mean = jnp.mean(x, axis=-1, keepdims=True)
    var = jnp.var(x, axis=-1, keepdims=True, ddof=1)   # torch.var (unbiased)
    x_std = (x - mean) / jnp.sqrt(var + EPS)
    p = jax.nn.sigmoid(x_std)
    return p * x + (1.0 - p) * x * weight


if __name__ == "__main__":
    # (batch, fields, num_parameters) -- D=128 keeps the layout lane-dense.
    B, F, D = 64, 4, 128

    key = jax.random.PRNGKey(0)
    kx, kw = jax.random.split(key, 2)

    x = jax.random.normal(kx, (B, F, D), dtype=jnp.float32)
    # Dice init = 0.25; perturb slightly so the weighted branch is exercised.
    weight = 0.25 + 0.05 * jax.random.normal(kw, (D,), dtype=jnp.float32)

    out = dice(x, weight)
    out = jax.block_until_ready(out)

    ref = _reference(x, weight)
    assert out.shape == (B, F, D)
    assert jnp.allclose(out, ref, atol=1e-5, rtol=1e-5), "mismatch vs reference"

    print("KERNEL_OK")
</pallas_src>

<mosaic_0001>
module attributes {stable_mosaic.version = 11 : i64} {
  func.func @_dice_kernel(%arg0: i32, %arg1: memref<128x128xf32, #tpu.memory_space<vmem>>, %arg2: memref<1x128xf32, #tpu.memory_space<vmem>>, %arg3: memref<128x128xf32, #tpu.memory_space<vmem>>) attributes {dimension_semantics = [#tpu.dimension_semantics<parallel>], iteration_bounds = array<i64: 2>, scalar_prefetch = 0 : i64, scratch_operands = 0 : i64, tpu.core_type = #tpu.core_type<tc>, window_params = [{transform_indices = @transform_0, window_bounds = array<i64: 128, 128>}, {pipeline_mode = #tpu.pipeline_mode<synchronous>, transform_indices = @transform_1, window_bounds = array<i64: 1, 128>}, {transform_indices = @transform_2, window_bounds = array<i64: 128, 128>}]} {
    %c0 = arith.constant 0 : index
    %c0_0 = arith.constant 0 : index
    %0 = vector.load %arg1[%c0, %c0_0] : memref<128x128xf32, #tpu.memory_space<vmem>>, vector<128x128xf32>
    %c0_1 = arith.constant 0 : index
    %c0_2 = arith.constant 0 : index
    %1 = vector.load %arg2[%c0_1, %c0_2] : memref<1x128xf32, #tpu.memory_space<vmem>>, vector<1x128xf32>
    %cst = arith.constant dense<0.000000e+00> : vector<128xf32>
    %2 = vector.multi_reduction <add>, %0, %cst [1] : vector<128x128xf32> to vector<128xf32>
    %3 = vector.shape_cast %2 : vector<128xf32> to vector<128x1xf32>
    %cst_3 = arith.constant 1.280000e+02 : f32
    %4 = vector.broadcast %cst_3 : f32 to vector<128x1xf32>
    %5 = arith.divf %3, %4 : vector<128x1xf32>
    %6 = vector.broadcast %5 : vector<128x1xf32> to vector<128x128xf32>
    %7 = arith.subf %0, %6 : vector<128x128xf32>
    %8 = arith.mulf %7, %7 : vector<128x128xf32>
    %cst_4 = arith.constant dense<0.000000e+00> : vector<128xf32>
    %9 = vector.multi_reduction <add>, %8, %cst_4 [1] : vector<128x128xf32> to vector<128xf32>
    %10 = vector.shape_cast %9 : vector<128xf32> to vector<128x1xf32>
    %cst_5 = arith.constant 0.00787401571 : f32
    %11 = vector.broadcast %cst_5 : f32 to vector<128x1xf32>
    %12 = arith.mulf %10, %11 : vector<128x1xf32>
    %cst_6 = arith.constant 9.99999993E-9 : f32
    %13 = vector.broadcast %cst_6 : f32 to vector<128x1xf32>
    %14 = arith.addf %12, %13 : vector<128x1xf32>
    %15 = math.rsqrt %14 : vector<128x1xf32>
    %16 = vector.broadcast %15 : vector<128x1xf32> to vector<128x128xf32>
    %17 = arith.mulf %7, %16 : vector<128x128xf32>
    %18 = arith.negf %17 : vector<128x128xf32>
    %19 = math.exp %18 : vector<128x128xf32>
    %cst_7 = arith.constant 1.000000e+00 : f32
    %20 = vector.broadcast %cst_7 : f32 to vector<128x128xf32>
    %21 = arith.addf %20, %19 : vector<128x128xf32>
    %22 = arith.divf %20, %21 : vector<128x128xf32>
    %23 = arith.mulf %22, %0 : vector<128x128xf32>
    %cst_8 = arith.constant 1.000000e+00 : f32
    %24 = vector.broadcast %cst_8 : f32 to vector<128x128xf32>
    %25 = arith.subf %24, %22 : vector<128x128xf32>
    %26 = arith.mulf %25, %0 : vector<128x128xf32>
    %27 = vector.broadcast %1 : vector<1x128xf32> to vector<128x128xf32>
    %28 = arith.mulf %26, %27 : vector<128x128xf32>
    %29 = arith.addf %23, %28 : vector<128x128xf32>
    %c0_9 = arith.constant 0 : index
    %c0_10 = arith.constant 0 : index
    %30 = vector.load %arg3[%c0_9, %c0_10] : memref<128x128xf32, #tpu.memory_space<vmem>>, vector<128x128xf32>
    tpu.vector_store %arg3[%c0_9, %c0_10], %29 {strides = array<i32>} : memref<128x128xf32, #tpu.memory_space<vmem>>, vector<128x128xf32>,
    return
  }
  func.func @transform_0(%arg0: i32) -> (i32, i32) {
    %c0_i32 = arith.constant 0 : i32
    %c0_i32_0 = arith.constant 0 : i32
    return %arg0, %c0_i32 : i32, i32
  }
  func.func @transform_1(%arg0: i32) -> (i32, i32) {
    %c0_i32 = arith.constant 0 : i32
    %c0_i32_0 = arith.constant 0 : i32
    %c0_i32_1 = arith.constant 0 : i32
    return %c0_i32, %c0_i32_0 : i32, i32
  }
  func.func @transform_2(%arg0: i32) -> (i32, i32) {
    %c0_i32 = arith.constant 0 : i32
    %c0_i32_0 = arith.constant 0 : i32
    return %arg0, %c0_i32 : i32, i32
  }
}

</mosaic_0001>

<llo_original>
// kernel: tpu_custom_call.1
$region0: #{tpu_custom_call.1}
  #allocation0 [shape = 'u32[]', space=smem, size = 0x4, offset = 0x4, fixed_abs, tag = 'smem constant byte address 0x4 - core index']
  #allocation1 [shape = 'u32[144,128]{1,0:T(1,128)}', space=vmem, size = 0x12000, scoped, tag = 'internal scratch']
  %s0 = inlined_call_operand.hbm [shape: f32[256,128], index: 0, kind: input, shape index: {}]
  %s1 = inlined_call_operand.vmem [shape: f32[1,128], index: 1, kind: input, shape index: {}]
  %s2 = inlined_call_operand.hbm [shape: f32[256,128], index: 2, kind: output, shape index: {}]
  %s3 = sld [smem:[#allocation0]]
  $region45: #{tpu_custom_call.1} parent=0
    _
  %s5 = ssub.s32 1, %s3
  %s6 = scalar_select 0, %s5, %s3
  $region1: #{tpu_custom_call.1} parent=0
    #allocation2 [shape = 'u8[131072]{0}', space=vmem, size = 0x20000, scoped, tag = 'input window, operand 0']
    #allocation3 [shape = 's32[2]{0}', space=sflag, size = 0x8, scoped, tag = 'scoped memory for tpu_custom_call.1']
    #allocation4 [shape = 's32[2]{0}', space=sflag, size = 0x8, scoped, tag = 'scoped memory for tpu_custom_call.1']
    #allocation5 [shape = 'u8[131072]{0}', space=vmem, size = 0x20000, scoped, tag = 'output window, operand 0']
    %7 = vsyncpa [#allocation3], 0
    %s8 = scalar_lea.sflag [#allocation3], 1
    %9 = vsyncpa %s8, 0
    %10 = vsyncpa [#allocation4], 0
    %s11 = scalar_lea.sflag [#allocation4], 1
    %12 = vsyncpa %s11, 0
    loop: start=0, step=1, limit=4
    $region2: #{tpu_custom_call.1} parent=1 // loop_pre_header
      _
    $region3: #{tpu_custom_call.1} parent=1 // loop_header
      %s14 = sphi 0, %s18
      %p15 = scmp.ge.s32.totalorder %s14, 4
      %s24 = sphi 0, %s26
      %s27 = sphi 0, %s24
      %s28 = sphi 0, %s27
      %s44 = sphi 0, %s28
      %s48 = sphi 0, %s48
      %s50 = sphi 0, %s48
      %s51 = sphi 0, %s50
      %s65 = sphi 0, %s51
      %s71 = sphi 0, %s73
      %s74 = sphi 0, %s71
      %s75 = sphi 0, %s74
      %s91 = sphi 0, %s75
    $region4: #{tpu_custom_call.1} parent=1 // loop_header_branch
      %17 = sbr.rel (%p15) target = $region8
    $region5: #{tpu_custom_call.1} parent=1 // loop_body
      %s19 = ssub.s32 %s14, 1
      %s20 = ssub.s32 %s14, 2
      %s21 = sadd.s32 %s14, 1
      %s22 = ssub.s32 %s14, %s21
      %p23 = scmp.eq.s32.totalorder %s22, 0
      %s25 = sadd.s32 %s24, 1
      %s26 = scalar_select %p23, %s24, %s25
      %p29 = pneg %p23
      %p30 = scmp.eq.s32.totalorder %s14, 1
      %p31 = por %p29, %p30
      %p32 = scmp.ne.s32.totalorder %s24, %s27
      %p33 = scmp.eq.s32.totalorder %s14, 0
      %p34 = por %p32, %p33
      %p35 = scmp.ne.s32.totalorder %s24, %s27
      %p36 = scmp.eq.s32.totalorder %s19, 1
      %p37 = por %p35, %p36
      %p38 = scmp.ne.s32.totalorder %s27, %s28
      %p39 = scmp.eq.s32.totalorder %s19, 0
      %p40 = por %p38, %p39
      %p41 = scmp.ne.s32.totalorder %s27, %s28
      %p42 = scmp.eq.s32.totalorder %s20, 1
      %p43 = por %p41, %p42
      %p45 = scmp.ne.s32.totalorder %s28, %s44
      %p46 = scmp.eq.s32.totalorder %s20, 0
      %p47 = por %p45, %p46
      %s49 = sadd.s32 %s48, 1
      %p52 = scmp.eq.s32.totalorder %s14, 1
      %p53 = scmp.ne.s32.totalorder %s48, %s50
      %p54 = scmp.eq.s32.totalorder %s14, 0
      %p55 = por %p53, %p54
      %p56 = scmp.ne.s32.totalorder %s48, %s50
      %p57 = scmp.eq.s32.totalorder %s19, 1
      %p58 = por %p56, %p57
      %p59 = scmp.ne.s32.totalorder %s50, %s51
      %p60 = scmp.eq.s32.totalorder %s19, 0
      %p61 = por %p59, %p60
      %p62 = scmp.ne.s32.totalorder %s50, %s51
      %p63 = scmp.eq.s32.totalorder %s20, 1
      %p64 = por %p62, %p63
      %p66 = scmp.ne.s32.totalorder %s51, %s65
      %p67 = scmp.eq.s32.totalorder %s20, 0
      %p68 = por %p66, %p67
      %s69 = ssub.s32 %s14, %s21
      %p70 = scmp.eq.s32.totalorder %s69, 0
      %s72 = sadd.s32 %s71, 1
      %s73 = scalar_select %p70, %s71, %s72
      %p76 = pneg %p70
      %p77 = scmp.eq.s32.totalorder %s14, 1
      %p78 = por %p76, %p77
      %p79 = scmp.ne.s32.totalorder %s71, %s74
      %p80 = scmp.eq.s32.totalorder %s14, 0
      %p81 = por %p79, %p80
      %p82 = scmp.ne.s32.totalorder %s71, %s74
      %p83 = scmp.eq.s32.totalorder %s19, 1
      %p84 = por %p82, %p83
      %p85 = scmp.ne.s32.totalorder %s74, %s75
      %p86 = scmp.eq.s32.totalorder %s19, 0
      %p87 = por %p85, %p86
      %p88 = scmp.ne.s32.totalorder %s74, %s75
      %p89 = scmp.eq.s32.totalorder %s20, 1
      %p90 = por %p88, %p89
      %p92 = scmp.ne.s32.totalorder %s75, %s91
      %p93 = scmp.eq.s32.totalorder %s20, 0
      %p94 = por %p92, %p93
      %p95 = scmp.le.s32.totalorder 1, %s14
      %p96 = scmp.lt.s32.totalorder %s14, 3
      %p97 = pnand %p95, %p96
      %p98 = pneg %p97
      // Predicated region
      $region9: #{tpu_custom_call.1} parent=5 // pred_check
        _
      $region10: #{tpu_custom_call.1} parent=5 // pred_check_branch
        %100 = sbr.rel (%p97) target = $region12
      $region11: #{tpu_custom_call.1} parent=5 // pred_region
        %s101 = ssub.s32 %s14, 1
        // Predicated region
        $region13: #{tpu_custom_call.1} parent=11 // pred_check
          %p102 = pneg %p61
        $region14: #{tpu_custom_call.1} parent=11 // pred_check_branch
          %104 = sbr.rel (%p102) target = $region16
        $region15: #{tpu_custom_call.1} parent=11 // pred_region
          _
        $region16: #{tpu_custom_call.1} parent=11 // pred_fallthru
          _
      $region12: #{tpu_custom_call.1} parent=5 // pred_fallthru
        _
      %p105 = scmp.lt.s32.totalorder %s14, 2
      // Predicated region
      $region17: #{tpu_custom_call.1} parent=5 // pred_check
        %p106 = pneg %p105
      $region18: #{tpu_custom_call.1} parent=5 // pred_check_branch
        %108 = sbr.rel (%p106) target = $region20
      $region19: #{tpu_custom_call.1} parent=5 // pred_region
        // Predicated region
        $region21: #{tpu_custom_call.1} parent=19 // pred_check
          %p109 = pneg %p34
        $region22: #{tpu_custom_call.1} parent=19 // pred_check_branch
          %111 = sbr.rel (%p109) target = $region24
        $region23: #{tpu_custom_call.1} parent=19 // pred_region
          %s112 = sand.u32 %s24, 1
          %s113 = scalar_lea.sflag [#allocation3], %s112
          %s114 = sand.u32 %s24, 1
          %s115 = smul.addr %s114, 128
          %s116 = scalar_lea.vmem [#allocation2], %s115
          %s117 = smul.u32 16, %s14
          %s119 = ssub.s32 2048, 2048
          %120 = vsyncadd %s113, %s119
          %s121 = smul.addr %s117, 128
          %s122 = scalar_lea.hbm %s0, %s121
          %s123 = sshll.u32 %s116, 4
          %s124 = int_to_ptr.vmem [resolvable:$true] %s123
          %129 = dma.hbm_to_vmem [thread:$0]  %s122, 2048, %s124, %s113, 128, 128, 8
        $region24: #{tpu_custom_call.1} parent=19 // pred_fallthru
          _
      $region20: #{tpu_custom_call.1} parent=5 // pred_fallthru
        _
      %p130 = scmp.le.s32.totalorder 1, %s14
      %p131 = scmp.lt.s32.totalorder %s14, 3
      %p132 = pnand %p130, %p131
      %p133 = pneg %p132
      // Predicated region
      $region25: #{tpu_custom_call.1} parent=5 // pred_check
        _
      $region26: #{tpu_custom_call.1} parent=5 // pred_check_branch
        %135 = sbr.rel (%p132) target = $region28
      $region27: #{tpu_custom_call.1} parent=5 // pred_region
        %s136 = ssub.s32 %s14, 1
        %s137 = sand.u32 %s27, 1
        %s138 = scalar_lea.sflag [#allocation3], %s137
        %s139 = sand.u32 %s27, 1
        %s140 = smul.addr %s139, 128
        %s141 = scalar_lea.vmem [#allocation2], %s140
        // Predicated region
        $region29: #{tpu_custom_call.1} parent=27 // pred_check
          %p142 = pneg %p40
        $region30: #{tpu_custom_call.1} parent=27 // pred_check_branch
          %144 = sbr.rel (%p142) target = $region32
        $region31: #{tpu_custom_call.1} parent=27 // pred_region
          %145 = dma.done %s138, 2048
        $region32: #{tpu_custom_call.1} parent=27 // pred_fallthru
          _
        %s146 = sand.u32 %s27, 1
        %s147 = scalar_lea.sflag [#allocation3], %s146
        %s148 = sand.u32 %s27, 1
        %s149 = smul.addr %s148, 128
        %s150 = scalar_lea.vmem [#allocation2], %s149
        %p151 = pneg %p40
        %p152 = pneg %p37
        %p153 = pneg %p61
        %p154 = pneg %p58
        %p155 = pneg %p87
        %p156 = pneg %p84
        %s157 = sand.u32 %s74, 1
        %s158 = scalar_lea.sflag [#allocation4], %s157
        %s159 = sand.u32 %s74, 1
        %s160 = smul.addr %s159, 128
        %s161 = scalar_lea.vmem [#allocation5], %s160
        %s162 = smul.u32 16, %s19
        %s163 = smul.u32 16, %s19
        %v164 = vld [vmem:[%s141] sm:$0xff]
        %v165 = vld [vmem:[%s141 + $0x8] sm:$0xff]
        %v166 = vld [vmem:[%s141 + $0x10] sm:$0xff]
        %v167 = vld [vmem:[%s141 + $0x18] sm:$0xff]
        %v168 = vld [vmem:[%s141 + $0x20] sm:$0xff]
        %v169 = vld [vmem:[%s141 + $0x28] sm:$0xff]
        %v170 = vld [vmem:[%s141 + $0x30] sm:$0xff]
        %v171 = vld [vmem:[%s141 + $0x38] sm:$0xff]
        %v172 = vld [vmem:[%s141 + $0x40] sm:$0xff]
        %v173 = vld [vmem:[%s141 + $0x48] sm:$0xff]
        %v174 = vld [vmem:[%s141 + $0x50] sm:$0xff]
        %v175 = vld [vmem:[%s141 + $0x58] sm:$0xff]
        %v176 = vld [vmem:[%s141 + $0x60] sm:$0xff]
        %v177 = vld [vmem:[%s141 + $0x68] sm:$0xff]
        %v178 = vld [vmem:[%s141 + $0x70] sm:$0xff]
        %v179 = vld [vmem:[%s141 + $0x78] sm:$0xff]
        %v180 = vld [vmem:[%s1] sm:$0x1]
        %181 = vadd.xlane.f32.xlu0 %v164
        %v182 = vpop.xlane.xlu0 %181
        %183 = vadd.xlane.f32.xlu0 %v165
        %v184 = vpop.xlane.xlu0 %183
        %185 = vadd.xlane.f32.xlu0 %v166
        %v186 = vpop.xlane.xlu0 %185
        %187 = vadd.xlane.f32.xlu0 %v167
        %v188 = vpop.xlane.xlu0 %187
        %189 = vadd.xlane.f32.xlu0 %v168
        %v190 = vpop.xlane.xlu0 %189
        %191 = vadd.xlane.f32.xlu0 %v169
        %v192 = vpop.xlane.xlu0 %191
        %193 = vadd.xlane.f32.xlu0 %v170
        %v194 = vpop.xlane.xlu0 %193
        %195 = vadd.xlane.f32.xlu0 %v171
        %v196 = vpop.xlane.xlu0 %195
        %197 = vadd.xlane.f32.xlu0 %v172
        %v198 = vpop.xlane.xlu0 %197
        %199 = vadd.xlane.f32.xlu0 %v173
        %v200 = vpop.xlane.xlu0 %199
        %201 = vadd.xlane.f32.xlu0 %v174
        %v202 = vpop.xlane.xlu0 %201
        %203 = vadd.xlane.f32.xlu0 %v175
        %v204 = vpop.xlane.xlu0 %203
        %205 = vadd.xlane.f32.xlu0 %v176
        %v206 = vpop.xlane.xlu0 %205
        %207 = vadd.xlane.f32.xlu0 %v177
        %v208 = vpop.xlane.xlu0 %207
        %209 = vadd.xlane.f32.xlu0 %v178
        %v210 = vpop.xlane.xlu0 %209
        %211 = vadd.xlane.f32.xlu0 %v179
        %v212 = vpop.xlane.xlu0 %211
        %v213 = vrcp.pop 128.0
        %v214 = vmul.f32 %v182, %v213
        %v215 = vmul.f32 %v184, %v213
        %v216 = vmul.f32 %v186, %v213
        %v217 = vmul.f32 %v188, %v213
        %v218 = vmul.f32 %v190, %v213
        %v219 = vmul.f32 %v192, %v213
        %v220 = vmul.f32 %v194, %v213
        %v221 = vmul.f32 %v196, %v213
        %v222 = vmul.f32 %v198, %v213
        %v223 = vmul.f32 %v200, %v213
        %v224 = vmul.f32 %v202, %v213
        %v225 = vmul.f32 %v204, %v213
        %v226 = vmul.f32 %v206, %v213
        %v227 = vmul.f32 %v208, %v213
        %v228 = vmul.f32 %v210, %v213
        %v229 = vmul.f32 %v212, %v213
        %v230 = vsub.f32 %v164, %v214
        %v231 = vsub.f32 %v165, %v215
        %v232 = vsub.f32 %v166, %v216
        %v233 = vsub.f32 %v167, %v217
        %v234 = vsub.f32 %v168, %v218
        %v235 = vsub.f32 %v169, %v219
        %v236 = vsub.f32 %v170, %v220
        %v237 = vsub.f32 %v171, %v221
        %v238 = vsub.f32 %v172, %v222
        %v239 = vsub.f32 %v173, %v223
        %v240 = vsub.f32 %v174, %v224
        %v241 = vsub.f32 %v175, %v225
        %v242 = vsub.f32 %v176, %v226
        %v243 = vsub.f32 %v177, %v227
        %v244 = vsub.f32 %v178, %v228
        %v245 = vsub.f32 %v179, %v229
        %v246 = vmul.f32 %v230, %v230
        %v247 = vmul.f32 %v231, %v231
        %v248 = vmul.f32 %v232, %v232
        %v249 = vmul.f32 %v233, %v233
        %v250 = vmul.f32 %v234, %v234
        %v251 = vmul.f32 %v235, %v235
        %v252 = vmul.f32 %v236, %v236
        %v253 = vmul.f32 %v237, %v237
        %v254 = vmul.f32 %v238, %v238
        %v255 = vmul.f32 %v239, %v239
        %v256 = vmul.f32 %v240, %v240
        %v257 = vmul.f32 %v241, %v241
        %v258 = vmul.f32 %v242, %v242
        %v259 = vmul.f32 %v243, %v243
        %v260 = vmul.f32 %v244, %v244
        %v261 = vmul.f32 %v245, %v245
        %262 = vadd.xlane.f32.xlu0 %v246
        %v263 = vpop.xlane.xlu0 %262
        %264 = vadd.xlane.f32.xlu0 %v247
        %v265 = vpop.xlane.xlu0 %264
        %266 = vadd.xlane.f32.xlu0 %v248
        %v267 = vpop.xlane.xlu0 %266
        %268 = vadd.xlane.f32.xlu0 %v249
        %v269 = vpop.xlane.xlu0 %268
        %270 = vadd.xlane.f32.xlu0 %v250
        %v271 = vpop.xlane.xlu0 %270
        %272 = vadd.xlane.f32.xlu0 %v251
        %v273 = vpop.xlane.xlu0 %272
        %274 = vadd.xlane.f32.xlu0 %v252
        %v275 = vpop.xlane.xlu0 %274
        %276 = vadd.xlane.f32.xlu0 %v253
        %v277 = vpop.xlane.xlu0 %276
        %278 = vadd.xlane.f32.xlu0 %v254
        %v279 = vpop.xlane.xlu0 %278
        %280 = vadd.xlane.f32.xlu0 %v255
        %v281 = vpop.xlane.xlu0 %280
        %282 = vadd.xlane.f32.xlu0 %v256
        %v283 = vpop.xlane.xlu0 %282
        %284 = vadd.xlane.f32.xlu0 %v257
        %v285 = vpop.xlane.xlu0 %284
        %286 = vadd.xlane.f32.xlu0 %v258
        %v287 = vpop.xlane.xlu0 %286
        %288 = vadd.xlane.f32.xlu0 %v259
        %v289 = vpop.xlane.xlu0 %288
        %290 = vadd.xlane.f32.xlu0 %v260
        %v291 = vpop.xlane.xlu0 %290
        %292 = vadd.xlane.f32.xlu0 %v261
        %v293 = vpop.xlane.xlu0 %292
        %v294 = vmul.f32 %v263, 0.007874016
        %v295 = vmul.f32 %v265, 0.007874016
        %v296 = vmul.f32 %v267, 0.007874016
        %v297 = vmul.f32 %v269, 0.007874016
        %v298 = vmul.f32 %v271, 0.007874016
        %v299 = vmul.f32 %v273, 0.007874016
        %v300 = vmul.f32 %v275, 0.007874016
        %v301 = vmul.f32 %v277, 0.007874016
        %v302 = vmul.f32 %v279, 0.007874016
        %v303 = vmul.f32 %v281, 0.007874016
        %v304 = vmul.f32 %v283, 0.007874016
        %v305 = vmul.f32 %v285, 0.007874016
        %v306 = vmul.f32 %v287, 0.007874016
        %v307 = vmul.f32 %v289, 0.007874016
        %v308 = vmul.f32 %v291, 0.007874016
        %v309 = vmul.f32 %v293, 0.007874016
        %v310 = vadd.f32 %v294, 1e-08
        %v311 = vadd.f32 %v295, 1e-08
        %v312 = vadd.f32 %v296, 1e-08
        %v313 = vadd.f32 %v297, 1e-08
        %v314 = vadd.f32 %v298, 1e-08
        %v315 = vadd.f32 %v299, 1e-08
        %v316 = vadd.f32 %v300, 1e-08
        %v317 = vadd.f32 %v301, 1e-08
        %v318 = vadd.f32 %v302, 1e-08
        %v319 = vadd.f32 %v303, 1e-08
        %v320 = vadd.f32 %v304, 1e-08
        %v321 = vadd.f32 %v305, 1e-08
        %v322 = vadd.f32 %v306, 1e-08
        %v323 = vadd.f32 %v307, 1e-08
        %v324 = vadd.f32 %v308, 1e-08
        %v325 = vadd.f32 %v309, 1e-08
        %v326 = vrsqrt.pop %v310
        %v327 = vrsqrt.pop %v311
        %v328 = vrsqrt.pop %v312
        %v329 = vrsqrt.pop %v313
        %v330 = vrsqrt.pop %v314
        %v331 = vrsqrt.pop %v315
        %v332 = vrsqrt.pop %v316
        %v333 = vrsqrt.pop %v317
        %v334 = vrsqrt.pop %v318
        %v335 = vrsqrt.pop %v319
        %v336 = vrsqrt.pop %v320
        %v337 = vrsqrt.pop %v321
        %v338 = vrsqrt.pop %v322
        %v339 = vrsqrt.pop %v323
        %v340 = vrsqrt.pop %v324
        %v341 = vrsqrt.pop %v325
        %v342 = vmul.f32 %v230, %v326
        %v343 = vmul.f32 %v231, %v327
        %v344 = vmul.f32 %v232, %v328
        %v345 = vmul.f32 %v233, %v329
        %v346 = vmul.f32 %v234, %v330
        %v347 = vmul.f32 %v235, %v331
        %v348 = vmul.f32 %v236, %v332
        %v349 = vmul.f32 %v237, %v333
        %v350 = vmul.f32 %v238, %v334
        %v351 = vmul.f32 %v239, %v335
        %v352 = vmul.f32 %v240, %v336
        %v353 = vmul.f32 %v241, %v337
        %v354 = vmul.f32 %v242, %v338
        %v355 = vmul.f32 %v243, %v339
        %v356 = vmul.f32 %v244, %v340
        %v357 = vmul.f32 %v245, %v341
        %v358 = vxor.u32 %v342, 2147483648
        %v359 = vxor.u32 %v343, 2147483648
        %v360 = vxor.u32 %v344, 2147483648
        %v361 = vxor.u32 %v345, 2147483648
        %v362 = vxor.u32 %v346, 2147483648
        %v363 = vxor.u32 %v347, 2147483648
        %v364 = vxor.u32 %v348, 2147483648
        %v365 = vxor.u32 %v349, 2147483648
        %v366 = vxor.u32 %v350, 2147483648
        %v367 = vxor.u32 %v351, 2147483648
        %v368 = vxor.u32 %v352, 2147483648
        %v369 = vxor.u32 %v353, 2147483648
        %v370 = vxor.u32 %v354, 2147483648
        %v371 = vxor.u32 %v355, 2147483648
        %v372 = vxor.u32 %v356, 2147483648
        %v373 = vxor.u32 %v357, 2147483648
        %v374 = vmul.f32 %v358, 1.442695
        %v375 = vpow.pop %v374
        %v376 = vmul.f32 %v359, 1.442695
        %v377 = vpow.pop %v376
        %v378 = vmul.f32 %v360, 1.442695
        %v379 = vpow.pop %v378
        %v380 = vmul.f32 %v361, 1.442695
        %v381 = vpow.pop %v380
        %v382 = vmul.f32 %v362, 1.442695
        %v383 = vpow.pop %v382
        %v384 = vmul.f32 %v363, 1.442695
        %v385 = vpow.pop %v384
        %v386 = vmul.f32 %v364, 1.442695
        %v387 = vpow.pop %v386
        %v388 = vmul.f32 %v365, 1.442695
        %v389 = vpow.pop %v388
        %v390 = vmul.f32 %v366, 1.442695
        %v391 = vpow.pop %v390
        %v392 = vmul.f32 %v367, 1.442695
        %v393 = vpow.pop %v392
        %v394 = vmul.f32 %v368, 1.442695
        %v395 = vpow.pop %v394
        %v396 = vmul.f32 %v369, 1.442695
        %v397 = vpow.pop %v396
        %v398 = vmul.f32 %v370, 1.442695
        %v399 = vpow.pop %v398
        %v400 = vmul.f32 %v371, 1.442695
        %v401 = vpow.pop %v400
        %v402 = vmul.f32 %v372, 1.442695
        %v403 = vpow.pop %v402
        %v404 = vmul.f32 %v373, 1.442695
        %v405 = vpow.pop %v404
        %v406 = vadd.f32 %v375, 1.0
        %v407 = vadd.f32 %v377, 1.0
        %v408 = vadd.f32 %v379, 1.0
        %v409 = vadd.f32 %v381, 1.0
        %v410 = vadd.f32 %v383, 1.0
        %v411 = vadd.f32 %v385, 1.0
        %v412 = vadd.f32 %v387, 1.0
        %v413 = vadd.f32 %v389, 1.0
        %v414 = vadd.f32 %v391, 1.0
        %v415 = vadd.f32 %v393, 1.0
        %v416 = vadd.f32 %v395, 1.0
        %v417 = vadd.f32 %v397, 1.0
        %v418 = vadd.f32 %v399, 1.0
        %v419 = vadd.f32 %v401, 1.0
        %v420 = vadd.f32 %v403, 1.0
        %v421 = vadd.f32 %v405, 1.0
        %v422 = vrcp.pop %v406
        %v423 = vmul.f32 1.0, %v422
        %v424 = vrcp.pop %v407
        %v425 = vmul.f32 1.0, %v424
        %v426 = vrcp.pop %v408
        %v427 = vmul.f32 1.0, %v426
        %v428 = vrcp.pop %v409
        %v429 = vmul.f32 1.0, %v428
        %v430 = vrcp.pop %v410
        %v431 = vmul.f32 1.0, %v430
        %v432 = vrcp.pop %v411
        %v433 = vmul.f32 1.0, %v432
        %v434 = vrcp.pop %v412
        %v435 = vmul.f32 1.0, %v434
        %v436 = vrcp.pop %v413
        %v437 = vmul.f32 1.0, %v436
        %v438 = vrcp.pop %v414
        %v439 = vmul.f32 1.0, %v438
        %v440 = vrcp.pop %v415
        %v441 = vmul.f32 1.0, %v440
        %v442 = vrcp.pop %v416
        %v443 = vmul.f32 1.0, %v442
        %v444 = vrcp.pop %v417
        %v445 = vmul.f32 1.0, %v444
        %v446 = vrcp.pop %v418
        %v447 = vmul.f32 1.0, %v446
        %v448 = vrcp.pop %v419
        %v449 = vmul.f32 1.0, %v448
        %v450 = vrcp.pop %v420
        %v451 = vmul.f32 1.0, %v450
        %v452 = vrcp.pop %v421
        %v453 = vmul.f32 1.0, %v452
        %v454 = vmul.f32 %v423, %v164
        %v455 = vmul.f32 %v425, %v165
        %v456 = vmul.f32 %v427, %v166
        %v457 = vmul.f32 %v429, %v167
        %v458 = vmul.f32 %v431, %v168
        %v459 = vmul.f32 %v433, %v169
        %v460 = vmul.f32 %v435, %v170
        %v461 = vmul.f32 %v437, %v171
        %v462 = vmul.f32 %v439, %v172
        %v463 = vmul.f32 %v441, %v173
        %v464 = vmul.f32 %v443, %v174
        %v465 = vmul.f32 %v445, %v175
        %v466 = vmul.f32 %v447, %v176
        %v467 = vmul.f32 %v449, %v177
        %v468 = vmul.f32 %v451, %v178
        %v469 = vmul.f32 %v453, %v179
        %v470 = vsub.f32 1.0, %v423
        %v471 = vsub.f32 1.0, %v425
        %v472 = vsub.f32 1.0, %v427
        %v473 = vsub.f32 1.0, %v429
        %v474 = vsub.f32 1.0, %v431
        %v475 = vsub.f32 1.0, %v433
        %v476 = vsub.f32 1.0, %v435
        %v477 = vsub.f32 1.0, %v437
        %v478 = vsub.f32 1.0, %v439
        %v479 = vsub.f32 1.0, %v441
        %v480 = vsub.f32 1.0, %v443
        %v481 = vsub.f32 1.0, %v445
        %v482 = vsub.f32 1.0, %v447
        %v483 = vsub.f32 1.0, %v449
        %v484 = vsub.f32 1.0, %v451
        %v485 = vsub.f32 1.0, %v453
        %v486 = vmul.f32 %v470, %v164
        %v487 = vmul.f32 %v471, %v165
        %v488 = vmul.f32 %v472, %v166
        %v489 = vmul.f32 %v473, %v167
        %v490 = vmul.f32 %v474, %v168
        %v491 = vmul.f32 %v475, %v169
        %v492 = vmul.f32 %v476, %v170
        %v493 = vmul.f32 %v477, %v171
        %v494 = vmul.f32 %v478, %v172
        %v495 = vmul.f32 %v479, %v173
        %v496 = vmul.f32 %v480, %v174
        %v497 = vmul.f32 %v481, %v175
        %v498 = vmul.f32 %v482, %v176
        %v499 = vmul.f32 %v483, %v177
        %v500 = vmul.f32 %v484, %v178
        %v501 = vmul.f32 %v485, %v179
        %v503 = vlaneseq
        %v504 = vshrl.u32 %v503, 7
        %v505 = vsub.s32 0, %v504
        %v506 = vrot.slane %v180, %v505
        %v508 = vmul.f32 %v486, %v506
        %v509 = vmul.f32 %v487, %v506
        %v510 = vmul.f32 %v488, %v506
        %v511 = vmul.f32 %v489, %v506
        %v512 = vmul.f32 %v490, %v506
        %v513 = vmul.f32 %v491, %v506
        %v514 = vmul.f32 %v492, %v506
        %v515 = vmul.f32 %v493, %v506
        %v516 = vmul.f32 %v494, %v506
        %v517 = vmul.f32 %v495, %v506
        %v518 = vmul.f32 %v496, %v506
        %v519 = vmul.f32 %v497, %v506
        %v520 = vmul.f32 %v498, %v506
        %v521 = vmul.f32 %v499, %v506
        %v522 = vmul.f32 %v500, %v506
        %v523 = vmul.f32 %v501, %v506
        %v524 = vadd.f32 %v454, %v508
        %v525 = vadd.f32 %v455, %v509
        %v526 = vadd.f32 %v456, %v510
        %v527 = vadd.f32 %v457, %v511
        %v528 = vadd.f32 %v458, %v512
        %v529 = vadd.f32 %v459, %v513
        %v530 = vadd.f32 %v460, %v514
        %v531 = vadd.f32 %v461, %v515
        %v532 = vadd.f32 %v462, %v516
        %v533 = vadd.f32 %v463, %v517
        %v534 = vadd.f32 %v464, %v518
        %v535 = vadd.f32 %v465, %v519
        %v536 = vadd.f32 %v466, %v520
        %v537 = vadd.f32 %v467, %v521
        %v538 = vadd.f32 %v468, %v522
        %v539 = vadd.f32 %v469, %v523
        %540 = vst [vmem:[%s161] sm:$0xff] %v524
        %541 = vst [vmem:[%s161 + $0x8] sm:$0xff] %v525
        %542 = vst [vmem:[%s161 + $0x10] sm:$0xff] %v526
        %543 = vst [vmem:[%s161 + $0x18] sm:$0xff] %v527
        %544 = vst [vmem:[%s161 + $0x20] sm:$0xff] %v528
        %545 = vst [vmem:[%s161 + $0x28] sm:$0xff] %v529
        %546 = vst [vmem:[%s161 + $0x30] sm:$0xff] %v530
        %547 = vst [vmem:[%s161 + $0x38] sm:$0xff] %v531
        %548 = vst [vmem:[%s161 + $0x40] sm:$0xff] %v532
        %549 = vst [vmem:[%s161 + $0x48] sm:$0xff] %v533
        %550 = vst [vmem:[%s161 + $0x50] sm:$0xff] %v534
        %551 = vst [vmem:[%s161 + $0x58] sm:$0xff] %v535
        %552 = vst [vmem:[%s161 + $0x60] sm:$0xff] %v536
        %553 = vst [vmem:[%s161 + $0x68] sm:$0xff] %v537
        %554 = vst [vmem:[%s161 + $0x70] sm:$0xff] %v538
        %555 = vst [vmem:[%s161 + $0x78] sm:$0xff] %v539
        %s556 = sand.u32 %s74, 1
        %s557 = scalar_lea.sflag [#allocation4], %s556
        %s558 = sand.u32 %s74, 1
        %s559 = smul.addr %s558, 128
        %s560 = scalar_lea.vmem [#allocation5], %s559
        // Predicated region
        $region33: #{tpu_custom_call.1} parent=27 // pred_check
          %p561 = pneg %p84
        $region34: #{tpu_custom_call.1} parent=27 // pred_check_branch
          %563 = sbr.rel (%p561) target = $region36
        $region35: #{tpu_custom_call.1} parent=27 // pred_region
          %s564 = smul.u32 16, %s19
          %s566 = ssub.s32 2048, 2048
          %567 = vsyncadd %s557, %s566
          %s568 = smul.addr %s564, 128
          %s569 = scalar_lea.hbm %s2, %s568
          %s570 = sshll.u32 %s560, 4
          %s571 = int_to_ptr.vmem [resolvable:$true] %s570
          %576 = dma.vmem_to_hbm [thread:$0]  %s571, 2048, %s569, %s557, 128, 128, 8
        $region36: #{tpu_custom_call.1} parent=27 // pred_fallthru
          _
      $region28: #{tpu_custom_call.1} parent=5 // pred_fallthru
        _
      %p577 = scmp.le.s32.totalorder 2, %s14
      // Predicated region
      $region37: #{tpu_custom_call.1} parent=5 // pred_check
        %p578 = pneg %p577
      $region38: #{tpu_custom_call.1} parent=5 // pred_check_branch
        %580 = sbr.rel (%p578) target = $region40
      $region39: #{tpu_custom_call.1} parent=5 // pred_region
        %s581 = ssub.s32 %s14, 2
        // Predicated region
        $region41: #{tpu_custom_call.1} parent=39 // pred_check
          %p582 = pneg %p90
        $region42: #{tpu_custom_call.1} parent=39 // pred_check_branch
          %584 = sbr.rel (%p582) target = $region44
        $region43: #{tpu_custom_call.1} parent=39 // pred_region
          %s585 = sand.u32 %s75, 1
          %s586 = scalar_lea.sflag [#allocation4], %s585
          %s587 = sand.u32 %s75, 1
          %s588 = smul.addr %s587, 128
          %s589 = scalar_lea.vmem [#allocation5], %s588
          %590 = dma.done %s586, 2048
        $region44: #{tpu_custom_call.1} parent=39 // pred_fallthru
          _
      $region40: #{tpu_custom_call.1} parent=5 // pred_fallthru
        _
    $region6: #{tpu_custom_call.1} parent=1 // loop_footer
      %s18 = sadd.s32 1, %s14
    $region7: #{tpu_custom_call.1} parent=1 // loop_footer_branch
      %13 = sbr.rel target = $region3
    $region8: #{tpu_custom_call.1} parent=1 // loop_exit
      _
    %591 = vsyncpa [#allocation3], 1
    %s592 = scalar_lea.sflag [#allocation3], 1
    %593 = vsyncpa %s592, 1
    %594 = vsyncpa [#allocation4], 1
    %s595 = scalar_lea.sflag [#allocation4], 1
    %596 = vsyncpa %s595, 1

</llo_original>
